<compile_context>
chip_gen: v7x
topology: tpu7x:2x2x1
jax: 0.10.0
libtpu: 0.0.40
codegen_flags: <defaults>
</compile_context>

<pallas_src>
import functools

import jax
import jax.numpy as jnp
from jax import lax
from jax.experimental import pallas as pl
from jax.experimental.pallas import tpu as pltpu


def _aspp_kernel(Cin, Cout, nmain,
                 xT_ref, wcatT_ref, wpoolT_ref, wprojT_ref, bncatT_ref, bntailT_ref,
                 o_ref):
    """Full ASPP forward for one batch element (transposed / column orientation).

    xT_ref    : (1, Kcat, HW) bf16           pre-built im2col, transposed (Kcat=(1+9R)*Cin)
    wcatT_ref : (nmain*Cout, Kcat) bf16       block-diagonal fused conv weight, transposed
    wpoolT_ref: (Cout, Cin) bf16              global-pool branch 1x1 conv, transposed
    wprojT_ref: (Cout, (nmain+1)*Cout) bf16   projection 1x1 conv, transposed
    bncatT_ref: (nmain*Cout, 2) f32           col0 = folded BN scale, col1 = bias (fused branches)
    bntailT_ref: (Cout, 4) f32                cols = [pool scale, pool bias, proj scale, proj bias]
    o_ref     : (1, Cout, HW) f32             lane-dense output (HW = 256 lanes)
    """
    f32 = jnp.float32
    bf16 = jnp.bfloat16

    xT = xT_ref[0]                                           # (Kcat, HW) bf16

    # ---- branch 0 + all dilated branches: ONE wide-K matmul, N = HW (lane-dense) --------
    yT = jnp.dot(wcatT_ref[...], xT, preferred_element_type=f32)   # (nmain*Cout, HW) f32
    bn = bncatT_ref[...]
    catT = jnp.maximum(yT * bn[:, 0:1] + bn[:, 1:2], 0.0).astype(bf16)

    tail = bntailT_ref[...]                                   # (Cout, 4) f32

    # ---- global-average-pool branch (bilinear upsample of a 1x1 map == broadcast) -------
    # Kept in column orientation: a rank-1 (Cout, 1) contribution, no transposes.
    xmT = jnp.mean(xT[:Cin, :].astype(f32), axis=1, keepdims=True)          # (Cin, 1)
    bpT = jnp.dot(wpoolT_ref[...], xmT.astype(bf16), preferred_element_type=f32)  # (Cout, 1)
    bpT = jnp.maximum(bpT * tail[:, 0:1] + tail[:, 1:2], 0.0).astype(bf16)

    # ---- projection: one K = nmain*Cout matmul + rank-1 pooling contribution ------------
    wprojT = wprojT_ref[...]
    projT = jnp.dot(wprojT[:, :nmain * Cout], catT, preferred_element_type=f32)   # (Cout, HW)
    projT = projT + jnp.dot(wprojT[:, nmain * Cout:], bpT,
                            preferred_element_type=f32)       # (Cout, 1) lane-broadcast
    projT = jnp.maximum(projT * tail[:, 2:3] + tail[:, 3:4], 0.0)

    # TODO(synk): Dropout(0.25) is eval-mode identity (no RNG mask / scaling).
    o_ref[0] = projT.astype(o_ref.dtype)                      # (Cout, HW) unmasked store


def aspp_forward(x, params, rates):
    """x: (N, Cin, H, W) float32  ->  (N, Cout, H, W) float32."""
    N, Cin, H, W = x.shape
    Cout = params["w0"].shape[1]
    R = len(rates)
    pad = max(rates)
    nmain = 1 + R                 # spatially varying branches (1x1 + R dilated)
    nb = nmain + 1                # + global-pool branch
    HW = H * W
    Kcat = (1 + 9 * R) * Cin
    bf16 = jnp.bfloat16

    # ---- wrapper-side im2col (layout plumbing, built once by XLA; ~229 KB at these sizes)
    x_pad = jnp.pad(x, ((0, 0), (0, 0), (pad, pad), (pad, pad))).astype(bf16)  # (N,Cin,Hp,Wp)

    def tap(dh, dw):
        return x_pad[:, :, pad + dh:pad + dh + H, pad + dw:pad + dw + W].reshape(N, Cin, HW)

    pieces = [tap(0, 0)]                                       # center (1x1 branch + pool mean)
    for d in rates:
        for ki in range(3):
            for kj in range(3):
                pieces.append(tap((ki - 1) * d, (kj - 1) * d))
    xcolT = jnp.concatenate(pieces, axis=1)                    # (N, Kcat, HW) bf16

    # ---- transposed block-diagonal fused conv weight: rows = branch outputs -------------
    w_catT = jnp.zeros((nmain * Cout, Kcat), jnp.float32)
    w_catT = w_catT.at[:Cout, :Cin].set(params["w0"].T)
    for r in range(R):
        c0 = Cin + r * 9 * Cin
        w_catT = w_catT.at[(1 + r) * Cout:(2 + r) * Cout, c0:c0 + 9 * Cin].set(
            params["wd"][r].reshape(9 * Cin, Cout).T)
    w_catT = w_catT.astype(bf16)

    w_poolT = params["wp"].T.astype(bf16)                      # (Cout, Cin)
    w_projT = params["wproj"].T.astype(bf16)                   # (Cout, nb*Cout)

    sc, bi = params["scale"], params["bias"]
    bn_catT = jnp.stack([sc[:nmain].reshape(-1),
                         bi[:nmain].reshape(-1)], axis=1).astype(jnp.float32)   # (nmain*Cout, 2)
    bn_tailT = jnp.stack([sc[nmain], bi[nmain],
                          sc[nmain + 1], bi[nmain + 1]], axis=1).astype(jnp.float32)  # (Cout, 4)

    kernel = functools.partial(_aspp_kernel, Cin, Cout, nmain)

    grid_spec = pltpu.PrefetchScalarGridSpec(
        num_scalar_prefetch=0,
        grid=(N,),
        in_specs=[
            pl.BlockSpec((1, Kcat, HW), lambda n: (n, 0, 0)),          # im2col^T per image
            pl.BlockSpec((nmain * Cout, Kcat), lambda n: (0, 0)),      # fused block-diag W^T
            pl.BlockSpec((Cout, Cin), lambda n: (0, 0)),               # pooling-branch 1x1^T
            pl.BlockSpec((Cout, nb * Cout), lambda n: (0, 0)),         # projection 1x1^T
            pl.BlockSpec((nmain * Cout, 2), lambda n: (0, 0)),         # BN scale/bias (fused)
            pl.BlockSpec((Cout, 4), lambda n: (0, 0)),                 # BN scale/bias (pool, proj)
        ],
        out_specs=pl.BlockSpec((1, Cout, HW), lambda n: (n, 0, 0)),
    )

    out = pl.pallas_call(
        kernel,
        out_shape=jax.ShapeDtypeStruct((N, Cout, HW), jnp.float32),
        grid_spec=grid_spec,
        compiler_params=pltpu.CompilerParams(dimension_semantics=("parallel",)),
    )(xcolT, w_catT, w_poolT, w_projT, bn_catT, bn_tailT)

    return out.reshape(N, Cout, H, W)                          # NCHW, reshape only


def make_params(key, Cin, Cout, rates):
    """Deterministic synthetic parameters; BN (eval) folded to per-channel scale/bias."""
    R = len(rates)
    nb = R + 2                    # 1x1 branch + R dilated + pooling branch
    keys = jax.random.split(key, 8)
    eps = 1e-5

    w0 = jax.random.normal(keys[0], (Cin, Cout), jnp.float32) * 0.1
    wd = jax.random.normal(keys[1], (R, 9, Cin, Cout), jnp.float32) * 0.1        # tap = ky*3+kx
    wp = jax.random.normal(keys[2], (Cin, Cout), jnp.float32) * 0.1
    wproj = jax.random.normal(keys[3], (nb * Cout, Cout), jnp.float32) * 0.1

    # nb+1 BatchNorms: branch0, R dilated branches, pooling branch, project
    gamma = jax.random.uniform(keys[4], (nb + 1, Cout), jnp.float32, 0.5, 1.5)
    beta = jax.random.normal(keys[5], (nb + 1, Cout), jnp.float32) * 0.1
    rmean = jax.random.normal(keys[6], (nb + 1, Cout), jnp.float32) * 0.1
    rvar = jax.random.uniform(keys[7], (nb + 1, Cout), jnp.float32, 0.5, 1.5)

    scale = gamma / jnp.sqrt(rvar + eps)
    bias = beta - rmean * scale

    return {"w0": w0, "wd": wd, "wp": wp, "wproj": wproj, "scale": scale, "bias": bias}


def aspp_reference(x, params, rates):
    """Pure-JAX (XLA) reference at matching operand precision (bf16 ops, f32 accumulation)."""
    N, Cin, H, W = x.shape
    Cout = params["w0"].shape[1]
    R = len(rates)
    sc, bi = params["scale"], params["bias"]
    bf16, f32 = jnp.bfloat16, jnp.float32

    def bn_relu(y, i):
        return jnp.maximum(y * sc[i] + bi[i], 0.0)

    xb = jnp.transpose(x, (0, 2, 3, 1)).astype(bf16)            # NHWC for the reference convs
    branches = [bn_relu(jnp.einsum("nhwc,cd->nhwd", xb, params["w0"].astype(bf16),
                                   preferred_element_type=f32), 0)]
    for i, d in enumerate(rates):
        w = params["wd"][i].reshape(3, 3, Cin, Cout).astype(bf16)          # HWIO
        y = lax.conv_general_dilated(
            xb, w, window_strides=(1, 1), padding=[(d, d), (d, d)],
            rhs_dilation=(d, d), dimension_numbers=("NHWC", "HWIO", "NHWC"),
            preferred_element_type=f32)
        branches.append(bn_relu(y, 1 + i))
    xm = jnp.mean(xb.astype(f32), axis=(1, 2), keepdims=True)              # (N,1,1,Cin)
    bp = bn_relu(jnp.einsum("nhwc,cd->nhwd", xm.astype(bf16), params["wp"].astype(bf16),
                            preferred_element_type=f32), R + 1)
    branches.append(jnp.broadcast_to(bp, (N, H, W, Cout)))
    cat = jnp.concatenate(branches, axis=-1).astype(bf16)
    out = jnp.einsum("nhwc,cd->nhwd", cat, params["wproj"].astype(bf16),
                     preferred_element_type=f32)
    out = bn_relu(out, R + 2)
    return jnp.transpose(out, (0, 3, 1, 2))                     # back to NCHW


if __name__ == "__main__":
    # small shapes consistent with the module: N=2, Cin=8, H=W=16, out_channels=32, rates=(1,2,3)
    N, Cin, H, W, Cout = 2, 8, 16, 16, 32
    rates = (1, 2, 3)

    key = jax.random.PRNGKey(0)
    kx, kp = jax.random.split(key)
    x = jax.random.normal(kx, (N, Cin, H, W), jnp.float32)
    params = make_params(kp, Cin, Cout, rates)

    out = jax.block_until_ready(aspp_forward(x, params, rates))
    ref = jax.block_until_ready(aspp_reference(x, params, rates))

    assert out.shape == (N, Cout, H, W)
    max_err = jnp.max(jnp.abs(out - ref))
    assert jnp.allclose(out, ref, atol=5e-3, rtol=5e-3), f"mismatch vs reference (max abs err {max_err})"

    print("KERNEL_OK")
</pallas_src>

<mosaic_0001>
module attributes {stable_mosaic.version = 11 : i64} {
  func.func @_aspp_kernel(%arg0: i32, %arg1: memref<1x224x256xbf16, #tpu.memory_space<vmem>>, %arg2: memref<128x224xbf16, #tpu.memory_space<vmem>>, %arg3: memref<32x8xbf16, #tpu.memory_space<vmem>>, %arg4: memref<32x160xbf16, #tpu.memory_space<vmem>>, %arg5: memref<128x2xf32, #tpu.memory_space<vmem>>, %arg6: memref<32x4xf32, #tpu.memory_space<vmem>>, %arg7: memref<1x32x256xf32, #tpu.memory_space<vmem>>) attributes {dimension_semantics = [#tpu.dimension_semantics<parallel>], iteration_bounds = array<i64: 2>, scalar_prefetch = 0 : i64, scratch_operands = 0 : i64, tpu.core_type = #tpu.core_type<tc>, window_params = [{transform_indices = @transform_0, window_bounds = array<i64: 1, 224, 256>}, {pipeline_mode = #tpu.pipeline_mode<synchronous>, transform_indices = @transform_1, window_bounds = array<i64: 128, 224>}, {pipeline_mode = #tpu.pipeline_mode<synchronous>, transform_indices = @transform_2, window_bounds = array<i64: 32, 8>}, {pipeline_mode = #tpu.pipeline_mode<synchronous>, transform_indices = @transform_3, window_bounds = array<i64: 32, 160>}, {pipeline_mode = #tpu.pipeline_mode<synchronous>, transform_indices = @transform_4, window_bounds = array<i64: 128, 2>}, {pipeline_mode = #tpu.pipeline_mode<synchronous>, transform_indices = @transform_5, window_bounds = array<i64: 32, 4>}, {transform_indices = @transform_6, window_bounds = array<i64: 1, 32, 256>}]} {
    %c0 = arith.constant 0 : index
    %c0_0 = arith.constant 0 : index
    %c0_1 = arith.constant 0 : index
    %0 = vector.load %arg1[%c0, %c0_0, %c0_1] : memref<1x224x256xbf16, #tpu.memory_space<vmem>>, vector<1x224x256xbf16>
    %1 = vector.shape_cast %0 : vector<1x224x256xbf16> to vector<224x256xbf16>
    %c0_2 = arith.constant 0 : index
    %c0_3 = arith.constant 0 : index
    %2 = vector.load %arg2[%c0_2, %c0_3] : memref<128x224xbf16, #tpu.memory_space<vmem>>, vector<128x224xbf16>
    %cst = arith.constant dense<0.000000e+00> : vector<128x256xf32>
    %3 = tpu.matmul %2, %1, %cst {dimension_numbers = #tpu.dot_dimension_numbers<[1], [0], [0], [1], [0, 0, 1, 1], [], []>} : vector<128x224xbf16>, vector<224x256xbf16>, vector<128x256xf32> -> vector<128x256xf32>
    %c0_4 = arith.constant 0 : index
    %c0_5 = arith.constant 0 : index
    %4 = vector.load %arg5[%c0_4, %c0_5] : memref<128x2xf32, #tpu.memory_space<vmem>>, vector<128x2xf32>
    %5 = vector.extract_strided_slice %4 {offsets = [0, 0], sizes = [128, 1], strides = [1, 1]} : vector<128x2xf32> to vector<128x1xf32>
    %6 = vector.broadcast %5 : vector<128x1xf32> to vector<128x256xf32>
    %7 = arith.mulf %3, %6 : vector<128x256xf32>
    %8 = vector.extract_strided_slice %4 {offsets = [0, 1], sizes = [128, 1], strides = [1, 1]} : vector<128x2xf32> to vector<128x1xf32>
    %9 = vector.broadcast %8 : vector<128x1xf32> to vector<128x256xf32>
    %10 = arith.addf %7, %9 : vector<128x256xf32>
    %cst_6 = arith.constant 0.000000e+00 : f32
    %11 = vector.broadcast %cst_6 : f32 to vector<128x256xf32>
    %12 = arith.maximumf %10, %11 : vector<128x256xf32>
    %13 = arith.truncf %12 : vector<128x256xf32> to vector<128x256xbf16>
    %c0_7 = arith.constant 0 : index
    %c0_8 = arith.constant 0 : index
    %14 = vector.load %arg6[%c0_7, %c0_8] : memref<32x4xf32, #tpu.memory_space<vmem>>, vector<32x4xf32>
    %15 = vector.extract_strided_slice %1 {offsets = [0, 0], sizes = [8, 256], strides = [1, 1]} : vector<224x256xbf16> to vector<8x256xbf16>
    %16 = arith.extf %15 : vector<8x256xbf16> to vector<8x256xf32>
    %cst_9 = arith.constant dense<0.000000e+00> : vector<8xf32>
    %17 = vector.multi_reduction <add>, %16, %cst_9 [1] : vector<8x256xf32> to vector<8xf32>
    %18 = vector.shape_cast %17 : vector<8xf32> to vector<8x1xf32>
    %cst_10 = arith.constant 2.560000e+02 : f32
    %19 = vector.broadcast %cst_10 : f32 to vector<8x1xf32>
    %20 = arith.divf %18, %19 : vector<8x1xf32>
    %c0_11 = arith.constant 0 : index
    %c0_12 = arith.constant 0 : index
    %21 = vector.load %arg3[%c0_11, %c0_12] : memref<32x8xbf16, #tpu.memory_space<vmem>>, vector<32x8xbf16>
    %22 = arith.truncf %20 : vector<8x1xf32> to vector<8x1xbf16>
    %cst_13 = arith.constant dense<0.000000e+00> : vector<32x1xf32>
    %23 = tpu.matmul %21, %22, %cst_13 {dimension_numbers = #tpu.dot_dimension_numbers<[1], [0], [0], [1], [0, 0, 1, 1], [], []>} : vector<32x8xbf16>, vector<8x1xbf16>, vector<32x1xf32> -> vector<32x1xf32>
    %24 = vector.extract_strided_slice %14 {offsets = [0, 0], sizes = [32, 1], strides = [1, 1]} : vector<32x4xf32> to vector<32x1xf32>
    %25 = arith.mulf %23, %24 : vector<32x1xf32>
    %26 = vector.extract_strided_slice %14 {offsets = [0, 1], sizes = [32, 1], strides = [1, 1]} : vector<32x4xf32> to vector<32x1xf32>
    %27 = arith.addf %25, %26 : vector<32x1xf32>
    %cst_14 = arith.constant 0.000000e+00 : f32
    %28 = vector.broadcast %cst_14 : f32 to vector<32x1xf32>
    %29 = arith.maximumf %27, %28 : vector<32x1xf32>
    %30 = arith.truncf %29 : vector<32x1xf32> to vector<32x1xbf16>
    %c0_15 = arith.constant 0 : index
    %c0_16 = arith.constant 0 : index
    %31 = vector.load %arg4[%c0_15, %c0_16] : memref<32x160xbf16, #tpu.memory_space<vmem>>, vector<32x160xbf16>
    %32 = vector.extract_strided_slice %31 {offsets = [0, 0], sizes = [32, 128], strides = [1, 1]} : vector<32x160xbf16> to vector<32x128xbf16>
    %cst_17 = arith.constant dense<0.000000e+00> : vector<32x256xf32>
    %33 = tpu.matmul %32, %13, %cst_17 {dimension_numbers = #tpu.dot_dimension_numbers<[1], [0], [0], [1], [0, 0, 1, 1], [], []>} : vector<32x128xbf16>, vector<128x256xbf16>, vector<32x256xf32> -> vector<32x256xf32>
    %34 = vector.extract_strided_slice %31 {offsets = [0, 128], sizes = [32, 32], strides = [1, 1]} : vector<32x160xbf16> to vector<32x32xbf16>
    %cst_18 = arith.constant dense<0.000000e+00> : vector<32x1xf32>
    %35 = tpu.matmul %34, %30, %cst_18 {dimension_numbers = #tpu.dot_dimension_numbers<[1], [0], [0], [1], [0, 0, 1, 1], [], []>} : vector<32x32xbf16>, vector<32x1xbf16>, vector<32x1xf32> -> vector<32x1xf32>
    %36 = vector.broadcast %35 : vector<32x1xf32> to vector<32x256xf32>
    %37 = arith.addf %33, %36 : vector<32x256xf32>
    %38 = vector.extract_strided_slice %14 {offsets = [0, 2], sizes = [32, 1], strides = [1, 1]} : vector<32x4xf32> to vector<32x1xf32>
    %39 = vector.broadcast %38 : vector<32x1xf32> to vector<32x256xf32>
    %40 = arith.mulf %37, %39 : vector<32x256xf32>
    %41 = vector.extract_strided_slice %14 {offsets = [0, 3], sizes = [32, 1], strides = [1, 1]} : vector<32x4xf32> to vector<32x1xf32>
    %42 = vector.broadcast %41 : vector<32x1xf32> to vector<32x256xf32>
    %43 = arith.addf %40, %42 : vector<32x256xf32>
    %cst_19 = arith.constant 0.000000e+00 : f32
    %44 = vector.broadcast %cst_19 : f32 to vector<32x256xf32>
    %45 = arith.maximumf %43, %44 : vector<32x256xf32>
    %c0_20 = arith.constant 0 : index
    %c0_21 = arith.constant 0 : index
    %c0_22 = arith.constant 0 : index
    %46 = vector.load %arg7[%c0_20, %c0_21, %c0_22] : memref<1x32x256xf32, #tpu.memory_space<vmem>>, vector<1x32x256xf32>
    %47 = vector.shape_cast %46 : vector<1x32x256xf32> to vector<32x256xf32>
    %48 = vector.shape_cast %45 : vector<32x256xf32> to vector<1x32x256xf32>
    tpu.vector_store %arg7[%c0_20, %c0_21, %c0_22], %48 {strides = array<i32>} : memref<1x32x256xf32, #tpu.memory_space<vmem>>, vector<1x32x256xf32>,
    return
  }
  func.func @transform_0(%arg0: i32) -> (i32, i32, i32) {
    %c0_i32 = arith.constant 0 : i32
    %c0_i32_0 = arith.constant 0 : i32
    %c0_i32_1 = arith.constant 0 : i32
    return %arg0, %c0_i32, %c0_i32_0 : i32, i32, i32
  }
  func.func @transform_1(%arg0: i32) -> (i32, i32) {
    %c0_i32 = arith.constant 0 : i32
    %c0_i32_0 = arith.constant 0 : i32
    %c0_i32_1 = arith.constant 0 : i32
    return %c0_i32, %c0_i32_0 : i32, i32
  }
  func.func @transform_2(%arg0: i32) -> (i32, i32) {
    %c0_i32 = arith.constant 0 : i32
    %c0_i32_0 = arith.constant 0 : i32
    %c0_i32_1 = arith.constant 0 : i32
    return %c0_i32, %c0_i32_0 : i32, i32
  }
  func.func @transform_3(%arg0: i32) -> (i32, i32) {
    %c0_i32 = arith.constant 0 : i32
    %c0_i32_0 = arith.constant 0 : i32
    %c0_i32_1 = arith.constant 0 : i32
    return %c0_i32, %c0_i32_0 : i32, i32
  }
  func.func @transform_4(%arg0: i32) -> (i32, i32) {
    %c0_i32 = arith.constant 0 : i32
    %c0_i32_0 = arith.constant 0 : i32
    %c0_i32_1 = arith.constant 0 : i32
    return %c0_i32, %c0_i32_0 : i32, i32
  }
  func.func @transform_5(%arg0: i32) -> (i32, i32) {
    %c0_i32 = arith.constant 0 : i32
    %c0_i32_0 = arith.constant 0 : i32
    %c0_i32_1 = arith.constant 0 : i32
    return %c0_i32, %c0_i32_0 : i32, i32
  }
  func.func @transform_6(%arg0: i32) -> (i32, i32, i32) {
    %c0_i32 = arith.constant 0 : i32
    %c0_i32_0 = arith.constant 0 : i32
    %c0_i32_1 = arith.constant 0 : i32
    return %arg0, %c0_i32, %c0_i32_0 : i32, i32, i32
  }
}

</mosaic_0001>

<llo_original>
// kernel: tpu_custom_call.1
$region0: #{tpu_custom_call.1}
  #allocation0 [shape = 'u32[]', space=smem, size = 0x4, offset = 0x4, fixed_abs, tag = 'smem constant byte address 0x4 - core index']
  #allocation1 [shape = 'u32[144,128]{1,0:T(1,128)}', space=vmem, size = 0x12000, scoped, tag = 'internal scratch']
  %s0 = inlined_call_operand.hbm [shape: bf16[2,224,256], index: 0, kind: input, shape index: {}]
  %s1 = inlined_call_operand.vmem [shape: bf16[128,224], index: 1, kind: input, shape index: {}]
  %s2 = inlined_call_operand.vmem [shape: bf16[32,8], index: 2, kind: input, shape index: {}]
  %s3 = inlined_call_operand.vmem [shape: bf16[32,160], index: 3, kind: input, shape index: {}]
  %s4 = inlined_call_operand.vmem [shape: f32[128,2], index: 4, kind: input, shape index: {}]
  %s5 = inlined_call_operand.vmem [shape: f32[32,4], index: 5, kind: input, shape index: {}]
  %s6 = inlined_call_operand.hbm [shape: f32[2,32,256], index: 6, kind: output, shape index: {}]
  %s7 = sld [smem:[#allocation0]]
  $region61: #{tpu_custom_call.1} parent=0
    _
  %s9 = ssub.s32 1, %s7
  %s10 = scalar_select 0, %s9, %s7
  $region1: #{tpu_custom_call.1} parent=0
    #allocation2 [shape = 'u8[229376]{0}', space=vmem, size = 0x38000, scoped, tag = 'input window, operand 0']
    #allocation3 [shape = 's32[2]{0}', space=sflag, size = 0x8, scoped, tag = 'scoped memory for tpu_custom_call.1']
    #allocation4 [shape = 's32[2]{0}', space=sflag, size = 0x8, scoped, tag = 'scoped memory for tpu_custom_call.1']
    #allocation5 [shape = 'u8[65536]{0}', space=vmem, size = 0x10000, scoped, tag = 'output window, operand 0']
    %11 = vsyncpa [#allocation3], 0
    %s12 = scalar_lea.sflag [#allocation3], 1
    %13 = vsyncpa %s12, 0
    %14 = vsyncpa [#allocation4], 0
    %s15 = scalar_lea.sflag [#allocation4], 1
    %16 = vsyncpa %s15, 0
    loop: start=0, step=1, limit=4
    $region2: #{tpu_custom_call.1} parent=1 // loop_pre_header
      _
    $region3: #{tpu_custom_call.1} parent=1 // loop_header
      %s18 = sphi 0, %s22
      %p19 = scmp.ge.s32.totalorder %s18, 4
      %s28 = sphi 0, %s30
      %s31 = sphi 0, %s28
      %s32 = sphi 0, %s31
      %s48 = sphi 0, %s32
      %s52 = sphi 0, %s52
      %s54 = sphi 0, %s52
      %s55 = sphi 0, %s54
      %s69 = sphi 0, %s55
      %s73 = sphi 0, %s73
      %s75 = sphi 0, %s73
      %s76 = sphi 0, %s75
      %s90 = sphi 0, %s76
      %s94 = sphi 0, %s94
      %s96 = sphi 0, %s94
      %s97 = sphi 0, %s96
      %s111 = sphi 0, %s97
      %s115 = sphi 0, %s115
      %s117 = sphi 0, %s115
      %s118 = sphi 0, %s117
      %s132 = sphi 0, %s118
      %s136 = sphi 0, %s136
      %s138 = sphi 0, %s136
      %s139 = sphi 0, %s138
      %s153 = sphi 0, %s139
      %s159 = sphi 0, %s161
      %s162 = sphi 0, %s159
      %s163 = sphi 0, %s162
      %s179 = sphi 0, %s163
    $region4: #{tpu_custom_call.1} parent=1 // loop_header_branch
      %21 = sbr.rel (%p19) target = $region8
    $region5: #{tpu_custom_call.1} parent=1 // loop_body
      %s23 = ssub.s32 %s18, 1
      %s24 = ssub.s32 %s18, 2
      %s25 = sadd.s32 %s18, 1
      %s26 = ssub.s32 %s18, %s25
      %p27 = scmp.eq.s32.totalorder %s26, 0
      %s29 = sadd.s32 %s28, 1
      %s30 = scalar_select %p27, %s28, %s29
      %p33 = pneg %p27
      %p34 = scmp.eq.s32.totalorder %s18, 1
      %p35 = por %p33, %p34
      %p36 = scmp.ne.s32.totalorder %s28, %s31
      %p37 = scmp.eq.s32.totalorder %s18, 0
      %p38 = por %p36, %p37
      %p39 = scmp.ne.s32.totalorder %s28, %s31
      %p40 = scmp.eq.s32.totalorder %s23, 1
      %p41 = por %p39, %p40
      %p42 = scmp.ne.s32.totalorder %s31, %s32
      %p43 = scmp.eq.s32.totalorder %s23, 0
      %p44 = por %p42, %p43
      %p45 = scmp.ne.s32.totalorder %s31, %s32
      %p46 = scmp.eq.s32.totalorder %s24, 1
      %p47 = por %p45, %p46
      %p49 = scmp.ne.s32.totalorder %s32, %s48
      %p50 = scmp.eq.s32.totalorder %s24, 0
      %p51 = por %p49, %p50
      %s53 = sadd.s32 %s52, 1
      %p56 = scmp.eq.s32.totalorder %s18, 1
      %p57 = scmp.ne.s32.totalorder %s52, %s54
      %p58 = scmp.eq.s32.totalorder %s18, 0
      %p59 = por %p57, %p58
      %p60 = scmp.ne.s32.totalorder %s52, %s54
      %p61 = scmp.eq.s32.totalorder %s23, 1
      %p62 = por %p60, %p61
      %p63 = scmp.ne.s32.totalorder %s54, %s55
      %p64 = scmp.eq.s32.totalorder %s23, 0
      %p65 = por %p63, %p64
      %p66 = scmp.ne.s32.totalorder %s54, %s55
      %p67 = scmp.eq.s32.totalorder %s24, 1
      %p68 = por %p66, %p67
      %p70 = scmp.ne.s32.totalorder %s55, %s69
      %p71 = scmp.eq.s32.totalorder %s24, 0
      %p72 = por %p70, %p71
      %s74 = sadd.s32 %s73, 1
      %p77 = scmp.eq.s32.totalorder %s18, 1
      %p78 = scmp.ne.s32.totalorder %s73, %s75
      %p79 = scmp.eq.s32.totalorder %s18, 0
      %p80 = por %p78, %p79
      %p81 = scmp.ne.s32.totalorder %s73, %s75
      %p82 = scmp.eq.s32.totalorder %s23, 1
      %p83 = por %p81, %p82
      %p84 = scmp.ne.s32.totalorder %s75, %s76
      %p85 = scmp.eq.s32.totalorder %s23, 0
      %p86 = por %p84, %p85
      %p87 = scmp.ne.s32.totalorder %s75, %s76
      %p88 = scmp.eq.s32.totalorder %s24, 1
      %p89 = por %p87, %p88
      %p91 = scmp.ne.s32.totalorder %s76, %s90
      %p92 = scmp.eq.s32.totalorder %s24, 0
      %p93 = por %p91, %p92
      %s95 = sadd.s32 %s94, 1
      %p98 = scmp.eq.s32.totalorder %s18, 1
      %p99 = scmp.ne.s32.totalorder %s94, %s96
      %p100 = scmp.eq.s32.totalorder %s18, 0
      %p101 = por %p99, %p100
      %p102 = scmp.ne.s32.totalorder %s94, %s96
      %p103 = scmp.eq.s32.totalorder %s23, 1
      %p104 = por %p102, %p103
      %p105 = scmp.ne.s32.totalorder %s96, %s97
      %p106 = scmp.eq.s32.totalorder %s23, 0
      %p107 = por %p105, %p106
      %p108 = scmp.ne.s32.totalorder %s96, %s97
      %p109 = scmp.eq.s32.totalorder %s24, 1
      %p110 = por %p108, %p109
      %p112 = scmp.ne.s32.totalorder %s97, %s111
      %p113 = scmp.eq.s32.totalorder %s24, 0
      %p114 = por %p112, %p113
      %s116 = sadd.s32 %s115, 1
      %p119 = scmp.eq.s32.totalorder %s18, 1
      %p120 = scmp.ne.s32.totalorder %s115, %s117
      %p121 = scmp.eq.s32.totalorder %s18, 0
      %p122 = por %p120, %p121
      %p123 = scmp.ne.s32.totalorder %s115, %s117
      %p124 = scmp.eq.s32.totalorder %s23, 1
      %p125 = por %p123, %p124
      %p126 = scmp.ne.s32.totalorder %s117, %s118
      %p127 = scmp.eq.s32.totalorder %s23, 0
      %p128 = por %p126, %p127
      %p129 = scmp.ne.s32.totalorder %s117, %s118
      %p130 = scmp.eq.s32.totalorder %s24, 1
      %p131 = por %p129, %p130
      %p133 = scmp.ne.s32.totalorder %s118, %s132
      %p134 = scmp.eq.s32.totalorder %s24, 0
      %p135 = por %p133, %p134
      %s137 = sadd.s32 %s136, 1
      %p140 = scmp.eq.s32.totalorder %s18, 1
      %p141 = scmp.ne.s32.totalorder %s136, %s138
      %p142 = scmp.eq.s32.totalorder %s18, 0
      %p143 = por %p141, %p142
      %p144 = scmp.ne.s32.totalorder %s136, %s138
      %p145 = scmp.eq.s32.totalorder %s23, 1
      %p146 = por %p144, %p145
      %p147 = scmp.ne.s32.totalorder %s138, %s139
      %p148 = scmp.eq.s32.totalorder %s23, 0
      %p149 = por %p147, %p148
      %p150 = scmp.ne.s32.totalorder %s138, %s139
      %p151 = scmp.eq.s32.totalorder %s24, 1
      %p152 = por %p150, %p151
      %p154 = scmp.ne.s32.totalorder %s139, %s153
      %p155 = scmp.eq.s32.totalorder %s24, 0
      %p156 = por %p154, %p155
      %s157 = ssub.s32 %s18, %s25
      %p158 = scmp.eq.s32.totalorder %s157, 0
      %s160 = sadd.s32 %s159, 1
      %s161 = scalar_select %p158, %s159, %s160
      %p164 = pneg %p158
      %p165 = scmp.eq.s32.totalorder %s18, 1
      %p166 = por %p164, %p165
      %p167 = scmp.ne.s32.totalorder %s159, %s162
      %p168 = scmp.eq.s32.totalorder %s18, 0
      %p169 = por %p167, %p168
      %p170 = scmp.ne.s32.totalorder %s159, %s162
      %p171 = scmp.eq.s32.totalorder %s23, 1
      %p172 = por %p170, %p171
      %p173 = scmp.ne.s32.totalorder %s162, %s163
      %p174 = scmp.eq.s32.totalorder %s23, 0
      %p175 = por %p173, %p174
      %p176 = scmp.ne.s32.totalorder %s162, %s163
      %p177 = scmp.eq.s32.totalorder %s24, 1
      %p178 = por %p176, %p177
      %p180 = scmp.ne.s32.totalorder %s163, %s179
      %p181 = scmp.eq.s32.totalorder %s24, 0
      %p182 = por %p180, %p181
      %p183 = scmp.le.s32.totalorder 1, %s18
      %p184 = scmp.lt.s32.totalorder %s18, 3
      %p185 = pnand %p183, %p184
      %p186 = pneg %p185
      // Predicated region
      $region9: #{tpu_custom_call.1} parent=5 // pred_check
        _
      $region10: #{tpu_custom_call.1} parent=5 // pred_check_branch
        %188 = sbr.rel (%p185) target = $region12
      $region11: #{tpu_custom_call.1} parent=5 // pred_region
        %s189 = ssub.s32 %s18, 1
        // Predicated region
        $region13: #{tpu_custom_call.1} parent=11 // pred_check
          %p190 = pneg %p65
        $region14: #{tpu_custom_call.1} parent=11 // pred_check_branch
          %192 = sbr.rel (%p190) target = $region16
        $region15: #{tpu_custom_call.1} parent=11 // pred_region
          _
        $region16: #{tpu_custom_call.1} parent=11 // pred_fallthru
          _
        // Predicated region
        $region17: #{tpu_custom_call.1} parent=11 // pred_check
          %p193 = pneg %p86
        $region18: #{tpu_custom_call.1} parent=11 // pred_check_branch
          %195 = sbr.rel (%p193) target = $region20
        $region19: #{tpu_custom_call.1} parent=11 // pred_region
          _
        $region20: #{tpu_custom_call.1} parent=11 // pred_fallthru
          _
        // Predicated region
        $region21: #{tpu_custom_call.1} parent=11 // pred_check
          %p196 = pneg %p107
        $region22: #{tpu_custom_call.1} parent=11 // pred_check_branch
          %198 = sbr.rel (%p196) target = $region24
        $region23: #{tpu_custom_call.1} parent=11 // pred_region
          _
        $region24: #{tpu_custom_call.1} parent=11 // pred_fallthru
          _
        // Predicated region
        $region25: #{tpu_custom_call.1} parent=11 // pred_check
          %p199 = pneg %p128
        $region26: #{tpu_custom_call.1} parent=11 // pred_check_branch
          %201 = sbr.rel (%p199) target = $region28
        $region27: #{tpu_custom_call.1} parent=11 // pred_region
          _
        $region28: #{tpu_custom_call.1} parent=11 // pred_fallthru
          _
        // Predicated region
        $region29: #{tpu_custom_call.1} parent=11 // pred_check
          %p202 = pneg %p149
        $region30: #{tpu_custom_call.1} parent=11 // pred_check_branch
          %204 = sbr.rel (%p202) target = $region32
        $region31: #{tpu_custom_call.1} parent=11 // pred_region
          _
        $region32: #{tpu_custom_call.1} parent=11 // pred_fallthru
          _
      $region12: #{tpu_custom_call.1} parent=5 // pred_fallthru
        _
      %p205 = scmp.lt.s32.totalorder %s18, 2
      // Predicated region
      $region33: #{tpu_custom_call.1} parent=5 // pred_check
        %p206 = pneg %p205
      $region34: #{tpu_custom_call.1} parent=5 // pred_check_branch
        %208 = sbr.rel (%p206) target = $region36
      $region35: #{tpu_custom_call.1} parent=5 // pred_region
        // Predicated region
        $region37: #{tpu_custom_call.1} parent=35 // pred_check
          %p209 = pneg %p38
        $region38: #{tpu_custom_call.1} parent=35 // pred_check_branch
          %211 = sbr.rel (%p209) target = $region40
        $region39: #{tpu_custom_call.1} parent=35 // pred_region
          %s212 = sand.u32 %s28, 1
          %s213 = scalar_lea.sflag [#allocation3], %s212
          %s214 = sand.u32 %s28, 1
          %s215 = smul.addr %s214, 224
          %s216 = scalar_lea.vmem [#allocation2], %s215
          %s218 = ssub.s32 3584, 3584
          %219 = vsyncadd %s213, %s218
          %s220 = smul.addr %s18, 56
          %s221 = smul.addr %s220, 64
          %s222 = scalar_lea.hbm %s0, %s221
          %s223 = sshll.u32 %s216, 4
          %s224 = int_to_ptr.vmem [resolvable:$true] %s223
          %229 = dma.hbm_to_vmem [thread:$0]  %s222, 3584, %s224, %s213, 128, 128, 8
        $region40: #{tpu_custom_call.1} parent=35 // pred_fallthru
          _
      $region36: #{tpu_custom_call.1} parent=5 // pred_fallthru
        _
      %p230 = scmp.le.s32.totalorder 1, %s18
      %p231 = scmp.lt.s32.totalorder %s18, 3
      %p232 = pnand %p230, %p231
      %p233 = pneg %p232
      // Predicated region
      $region41: #{tpu_custom_call.1} parent=5 // pred_check
        _
      $region42: #{tpu_custom_call.1} parent=5 // pred_check_branch
        %235 = sbr.rel (%p232) target = $region44
      $region43: #{tpu_custom_call.1} parent=5 // pred_region
        %s236 = ssub.s32 %s18, 1
        %s237 = sand.u32 %s31, 1
        %s238 = scalar_lea.sflag [#allocation3], %s237
        %s239 = sand.u32 %s31, 1
        %s240 = smul.addr %s239, 224
        %s241 = scalar_lea.vmem [#allocation2], %s240
        // Predicated region
        $region45: #{tpu_custom_call.1} parent=43 // pred_check
          %p242 = pneg %p44
        $region46: #{tpu_custom_call.1} parent=43 // pred_check_branch
          %244 = sbr.rel (%p242) target = $region48
        $region47: #{tpu_custom_call.1} parent=43 // pred_region
          %245 = dma.done %s238, 3584
        $region48: #{tpu_custom_call.1} parent=43 // pred_fallthru
          _
        %s246 = sand.u32 %s31, 1
        %s247 = scalar_lea.sflag [#allocation3], %s246
        %s248 = sand.u32 %s31, 1
        %s249 = smul.addr %s248, 224
        %s250 = scalar_lea.vmem [#allocation2], %s249
        %p251 = pneg %p44
        %p252 = pneg %p41
        %p253 = pneg %p65
        %p254 = pneg %p62
        %p255 = pneg %p86
        %p256 = pneg %p83
        %p257 = pneg %p107
        %p258 = pneg %p104
        %p259 = pneg %p128
        %p260 = pneg %p125
        %p261 = pneg %p149
        %p262 = pneg %p146
        %p263 = pneg %p175
        %p264 = pneg %p172
        %s265 = sand.u32 %s162, 1
        %s266 = scalar_lea.sflag [#allocation4], %s265
        %s267 = sand.u32 %s162, 1
        %s268 = smul.addr %s267, 64
        %s269 = scalar_lea.vmem [#allocation5], %s268
        %v271 = vld [vmem:[%s241] sm:$0xff]
        %v272 = vld [vmem:[%s241 + $0x8] sm:$0xff]
        %v273 = vld [vmem:[%s241 + $0x10] sm:$0xff]
        %v274 = vld [vmem:[%s241 + $0x18] sm:$0xff]
        %v275 = vld [vmem:[%s241 + $0x20] sm:$0xff]
        %v276 = vld [vmem:[%s241 + $0x28] sm:$0xff]
        %v277 = vld [vmem:[%s241 + $0x30] sm:$0xff]
        %v278 = vld [vmem:[%s241 + $0x38] sm:$0xff]
        %v279 = vld [vmem:[%s241 + $0x40] sm:$0xff]
        %v280 = vld [vmem:[%s241 + $0x48] sm:$0xff]
        %v281 = vld [vmem:[%s241 + $0x50] sm:$0xff]
        %v282 = vld [vmem:[%s241 + $0x58] sm:$0xff]
        %v283 = vld [vmem:[%s241 + $0x60] sm:$0xff]
        %v284 = vld [vmem:[%s241 + $0x68] sm:$0xff]
        %v285 = vld [vmem:[%s241 + $0x70] sm:$0xff]
        %v286 = vld [vmem:[%s241 + $0x78] sm:$0xff]
        %v287 = vld [vmem:[%s241 + $0x80] sm:$0xff]
        %v288 = vld [vmem:[%s241 + $0x88] sm:$0xff]
        %v289 = vld [vmem:[%s241 + $0x90] sm:$0xff]
        %v290 = vld [vmem:[%s241 + $0x98] sm:$0xff]
        %v291 = vld [vmem:[%s241 + $0xa0] sm:$0xff]
        %v292 = vld [vmem:[%s241 + $0xa8] sm:$0xff]
        %v293 = vld [vmem:[%s241 + $0xb0] sm:$0xff]
        %v294 = vld [vmem:[%s241 + $0xb8] sm:$0xff]
        %v295 = vld [vmem:[%s241 + $0xc0] sm:$0xff]
        %v296 = vld [vmem:[%s241 + $0xc8] sm:$0xff]
        %v297 = vld [vmem:[%s241 + $0xd0] sm:$0xff]
        %v298 = vld [vmem:[%s241 + $0xd8] sm:$0xff]
        %v299 = vld [vmem:[%s1] sm:$0xff]
        %v300 = vld [vmem:[%s1 + $0x8] sm:$0xff]
        %v301 = vld [vmem:[%s1 + $0x10] sm:$0xff]
        %v302 = vld [vmem:[%s1 + $0x18] sm:$0xff]
        %v303 = vld [vmem:[%s1 + $0x20] sm:$0xff]
        %v304 = vld [vmem:[%s1 + $0x28] sm:$0xff]
        %v305 = vld [vmem:[%s1 + $0x30] sm:$0xff]
        %v306 = vld [vmem:[%s1 + $0x38] sm:$0xff]
        %v307 = vld [vmem:[%s1 + $0x40] sm:$0xff]
        %v308 = vld [vmem:[%s1 + $0x48] sm:$0xff]
        %v309 = vld [vmem:[%s1 + $0x50] sm:$0xff]
        %v310 = vld [vmem:[%s1 + $0x58] sm:$0xff]
        %v311 = vld [vmem:[%s1 + $0x60] sm:$0xff]
        %v312 = vld [vmem:[%s1 + $0x68] sm:$0xff]
        %v313 = vld [vmem:[%s1 + $0x70] sm:$0xff]
        %v314 = vld [vmem:[%s1 + $0x78] sm:$0xff]
        %v331 = vunpack.c.l.b16 %v299
        %v332 = vunpack.c.h.b16 %v299
        %v333 = vunpack.c.l.b16 %v300
        %v334 = vunpack.c.h.b16 %v300
        %v335 = vunpack.c.l.b16 %v301
        %v336 = vunpack.c.h.b16 %v301
        %v337 = vunpack.c.l.b16 %v302
        %v338 = vunpack.c.h.b16 %v302
        %v339 = vunpack.c.l.b16 %v303
        %v340 = vunpack.c.h.b16 %v303
        %v341 = vunpack.c.l.b16 %v304
        %v342 = vunpack.c.h.b16 %v304
        %v343 = vunpack.c.l.b16 %v305
        %v344 = vunpack.c.h.b16 %v305
        %v345 = vunpack.c.l.b16 %v306
        %v346 = vunpack.c.h.b16 %v306
        %v347 = vunpack.c.l.b16 %v307
        %v348 = vunpack.c.h.b16 %v307
        %v349 = vunpack.c.l.b16 %v308
        %v350 = vunpack.c.h.b16 %v308
        %v351 = vunpack.c.l.b16 %v309
        %v352 = vunpack.c.h.b16 %v309
        %v353 = vunpack.c.l.b16 %v310
        %v354 = vunpack.c.h.b16 %v310
        %v355 = vunpack.c.l.b16 %v311
        %v356 = vunpack.c.h.b16 %v311
        %v357 = vunpack.c.l.b16 %v312
        %v358 = vunpack.c.h.b16 %v312
        %v359 = vunpack.c.l.b16 %v313
        %v360 = vunpack.c.h.b16 %v313
        %v361 = vunpack.c.l.b16 %v314
        %v362 = vunpack.c.h.b16 %v314
        %v363 = vpack.c.b16 %v333, %v331
        %v364 = vpack.c.b16 %v334, %v332
        %v365 = vpack.c.b16 %v337, %v335
        %v366 = vpack.c.b16 %v338, %v336
        %v367 = vpack.c.b16 %v341, %v339
        %v368 = vpack.c.b16 %v342, %v340
        %v369 = vpack.c.b16 %v345, %v343
        %v370 = vpack.c.b16 %v346, %v344
        %v371 = vpack.c.b16 %v349, %v347
        %v372 = vpack.c.b16 %v350, %v348
        %v373 = vpack.c.b16 %v353, %v351
        %v374 = vpack.c.b16 %v354, %v352
        %v375 = vpack.c.b16 %v357, %v355
        %v376 = vpack.c.b16 %v358, %v356
        %v377 = vpack.c.b16 %v361, %v359
        %v378 = vpack.c.b16 %v362, %v360
        %v415 = vunpack.c.l.b16 %v271
        %v416 = vunpack.c.h.b16 %v271
        %v417 = vunpack.c.l.b16 %v272
        %v418 = vunpack.c.h.b16 %v272
        %v419 = vunpack.c.l.b16 %v273
        %v420 = vunpack.c.h.b16 %v273
        %v421 = vunpack.c.l.b16 %v274
        %v422 = vunpack.c.h.b16 %v274
        %v423 = vunpack.c.l.b16 %v275
        %v424 = vunpack.c.h.b16 %v275
        %v425 = vunpack.c.l.b16 %v276
        %v426 = vunpack.c.h.b16 %v276
        %v427 = vunpack.c.l.b16 %v277
        %v428 = vunpack.c.h.b16 %v277
        %v429 = vunpack.c.l.b16 %v278
        %v430 = vunpack.c.h.b16 %v278
        %v431 = vunpack.c.l.b16 %v279
        %v432 = vunpack.c.h.b16 %v279
        %v433 = vunpack.c.l.b16 %v280
        %v434 = vunpack.c.h.b16 %v280
        %v435 = vunpack.c.l.b16 %v281
        %v436 = vunpack.c.h.b16 %v281
        %v437 = vunpack.c.l.b16 %v282
        %v438 = vunpack.c.h.b16 %v282
        %v439 = vunpack.c.l.b16 %v283
        %v440 = vunpack.c.h.b16 %v283
        %v441 = vunpack.c.l.b16 %v284
        %v442 = vunpack.c.h.b16 %v284
        %v443 = vunpack.c.l.b16 %v285
        %v444 = vunpack.c.h.b16 %v285
        %v445 = vunpack.c.l.b16 %v286
        %v446 = vunpack.c.h.b16 %v286
        %v447 = vunpack.c.l.b16 %v287
        %v448 = vunpack.c.h.b16 %v287
        %v449 = vunpack.c.l.b16 %v288
        %v450 = vunpack.c.h.b16 %v288
        %v451 = vunpack.c.l.b16 %v289
        %v452 = vunpack.c.h.b16 %v289
        %v453 = vunpack.c.l.b16 %v290
        %v454 = vunpack.c.h.b16 %v290
        %v455 = vunpack.c.l.b16 %v291
        %v456 = vunpack.c.h.b16 %v291
        %v457 = vunpack.c.l.b16 %v292
        %v458 = vunpack.c.h.b16 %v292
        %v459 = vunpack.c.l.b16 %v293
        %v460 = vunpack.c.h.b16 %v293
        %v461 = vunpack.c.l.b16 %v294
        %v462 = vunpack.c.h.b16 %v294
        %v463 = vunpack.c.l.b16 %v295
        %v464 = vunpack.c.h.b16 %v295
        %v465 = vunpack.c.l.b16 %v296
        %v466 = vunpack.c.h.b16 %v296
        %v467 = vunpack.c.l.b16 %v297
        %v468 = vunpack.c.h.b16 %v297
        %v469 = vunpack.c.l.b16 %v298
        %v470 = vunpack.c.h.b16 %v298
        %v471 = vpack.c.b16 %v417, %v415
        %v472 = vpack.c.b16 %v418, %v416
        %v473 = vpack.c.b16 %v421, %v419
        %v474 = vpack.c.b16 %v422, %v420
        %v475 = vpack.c.b16 %v425, %v423
        %v476 = vpack.c.b16 %v426, %v424
        %v477 = vpack.c.b16 %v429, %v427
        %v478 = vpack.c.b16 %v430, %v428
        %v479 = vpack.c.b16 %v433, %v431
        %v480 = vpack.c.b16 %v434, %v432
        %v481 = vpack.c.b16 %v437, %v435
        %v482 = vpack.c.b16 %v438, %v436
        %v483 = vpack.c.b16 %v441, %v439
        %v484 = vpack.c.b16 %v442, %v440
        %v485 = vpack.c.b16 %v445, %v443
        %v486 = vpack.c.b16 %v446, %v444
        %v487 = vpack.c.b16 %v449, %v447
        %v488 = vpack.c.b16 %v450, %v448
        %v489 = vpack.c.b16 %v453, %v451
        %v490 = vpack.c.b16 %v454, %v452
        %v491 = vpack.c.b16 %v457, %v455
        %v492 = vpack.c.b16 %v458, %v456
        %v493 = vpack.c.b16 %v461, %v459
        %v494 = vpack.c.b16 %v462, %v460
        %v495 = vpack.c.b16 %v465, %v463
        %v496 = vpack.c.b16 %v466, %v464
        %v497 = vpack.c.b16 %v469, %v467
        %v498 = vpack.c.b16 %v470, %v468
        %vm527 = vcmask 785408
        %v529 = vsel %vm527, %v364, 0
        %v532 = vsel %vm527, %v366, 0
        %v535 = vsel %vm527, %v368, 0
        %v538 = vsel %vm527, %v370, 0
        %v541 = vsel %vm527, %v372, 0
        %v544 = vsel %vm527, %v374, 0
        %v547 = vsel %vm527, %v376, 0
        %v550 = vsel %vm527, %v378, 0
        %552 = vmatprep.subr.bf16.mxu0 %v472
        %553 = vmatpush1.bf16.msra.mxu0 %v471
        %554 = vmatprep.subr.bf16.mxu0 %v474
        %555 = vmatpush1.bf16.msra.mxu0 %v473
        %556 = vmatprep.subr.bf16.mxu0 %v476
        %557 = vmatpush1.bf16.msra.mxu0 %v475
        %558 = vmatprep.subr.bf16.mxu0 %v478
        %559 = vmatpush1.bf16.msra.mxu0 %v477
        %560 = vmatprep.subr.bf16.mxu0 %v480
        %561 = vmatpush1.bf16.msra.mxu0 %v479
        %562 = vmatprep.subr.bf16.mxu0 %v482
        %563 = vmatpush1.bf16.msra.mxu0 %v481
        %564 = vmatprep.subr.bf16.mxu0 %v484
        %565 = vmatpush1.bf16.msra.mxu0 %v483
        %566 = vmatprep.subr.bf16.mxu0 %v486
        %567 = vmatpush1.bf16.msra.mxu0 %v485
        %568 = vmatprep.subr.bf16.mxu0 %v488
        %569 = vmatpush1.bf16.msra.mxu0 %v487
        %570 = vmatprep.subr.bf16.mxu0 %v490
        %571 = vmatpush1.bf16.msra.mxu0 %v489
        %572 = vmatprep.subr.bf16.mxu0 %v492
        %573 = vmatpush1.bf16.msra.mxu0 %v491
        %574 = vmatprep.subr.bf16.mxu0 %v494
        %575 = vmatpush1.bf16.msra.mxu0 %v493
        %576 = vmatprep.subr.bf16.mxu0 %v496
        %577 = vmatpush1.bf16.msra.mxu0 %v495
        %578 = vmatprep.subr.bf16.mxu0 %v498
        %579 = vmatpush1.bf16.msra.mxu0 %v497
        %580 = vmatprep.subr.bf16.mxu0 0
        %581 = vmatpush1.bf16.msra.mxu0 0
        %582 = vmatprep.subr.bf16.mxu0 0
        %583 = vmatpush1.bf16.msra.mxu0 0
        %584 = vmatprep.mubr.bf16.mxu0 %v529
        %585 = vmatmul.mubr.bf16.gmra.mrb[0].mxu0 %v363
        %v586 = vpop.f32.mrb[0].mxu0
        %v587 = vadd.f32 0.0, %v586
        %v588 = vpop.f32.mrb[0].mxu0
        %v589 = vadd.f32 0.0, %v588
        %v590 = vpop.f32.mrb[0].mxu0
        %v591 = vadd.f32 0.0, %v590
        %v592 = vpop.f32.mrb[0].mxu0
        %v593 = vadd.f32 0.0, %v592
        %594 = vmatprep.mubr.bf16.mxu0 %v532
        %595 = vmatmul.mubr.bf16.gmra.mrb[0].mxu0 %v365
        %v596 = vpop.f32.mrb[0].mxu0
        %v597 = vadd.f32 0.0, %v596
        %v598 = vpop.f32.mrb[0].mxu0
        %v599 = vadd.f32 0.0, %v598
        %v600 = vpop.f32.mrb[0].mxu0
        %v601 = vadd.f32 0.0, %v600
        %v602 = vpop.f32.mrb[0].mxu0
        %v603 = vadd.f32 0.0, %v602
        %604 = vmatprep.mubr.bf16.mxu0 %v535
        %605 = vmatmul.mubr.bf16.gmra.mrb[0].mxu0 %v367
        %v606 = vpop.f32.mrb[0].mxu0
        %v607 = vadd.f32 0.0, %v606
        %v608 = vpop.f32.mrb[0].mxu0
        %v609 = vadd.f32 0.0, %v608
        %v610 = vpop.f32.mrb[0].mxu0
        %v611 = vadd.f32 0.0, %v610
        %v612 = vpop.f32.mrb[0].mxu0
        %v613 = vadd.f32 0.0, %v612
        %614 = vmatprep.mubr.bf16.mxu0 %v538
        %615 = vmatmul.mubr.bf16.gmra.mrb[0].mxu0 %v369
        %v616 = vpop.f32.mrb[0].mxu0
        %v617 = vadd.f32 0.0, %v616
        %v618 = vpop.f32.mrb[0].mxu0
        %v619 = vadd.f32 0.0, %v618
        %v620 = vpop.f32.mrb[0].mxu0
        %v621 = vadd.f32 0.0, %v620
        %v622 = vpop.f32.mrb[0].mxu0
        %v623 = vadd.f32 0.0, %v622
        %624 = vmatprep.mubr.bf16.mxu0 %v541
        %625 = vmatmul.mubr.bf16.gmra.mrb[0].mxu0 %v371
        %v626 = vpop.f32.mrb[0].mxu0
        %v627 = vadd.f32 0.0, %v626
        %v628 = vpop.f32.mrb[0].mxu0
        %v629 = vadd.f32 0.0, %v628
        %v630 = vpop.f32.mrb[0].mxu0
        %v631 = vadd.f32 0.0, %v630
        %v632 = vpop.f32.mrb[0].mxu0
        %v633 = vadd.f32 0.0, %v632
        %634 = vmatprep.mubr.bf16.mxu0 %v544
        %635 = vmatmul.mubr.bf16.gmra.mrb[0].mxu0 %v373
        %v636 = vpop.f32.mrb[0].mxu0
        %v637 = vadd.f32 0.0, %v636
        %v638 = vpop.f32.mrb[0].mxu0
        %v639 = vadd.f32 0.0, %v638
        %v640 = vpop.f32.mrb[0].mxu0
        %v641 = vadd.f32 0.0, %v640
        %v642 = vpop.f32.mrb[0].mxu0
        %v643 = vadd.f32 0.0, %v642
        %644 = vmatprep.mubr.bf16.mxu0 %v547
        %645 = vmatmul.mubr.bf16.gmra.mrb[0].mxu0 %v375
        %v646 = vpop.f32.mrb[0].mxu0
        %v647 = vadd.f32 0.0, %v646
        %v648 = vpop.f32.mrb[0].mxu0
        %v649 = vadd.f32 0.0, %v648
        %v650 = vpop.f32.mrb[0].mxu0
        %v651 = vadd.f32 0.0, %v650
        %v652 = vpop.f32.mrb[0].mxu0
        %v653 = vadd.f32 0.0, %v652
        %654 = vmatprep.mubr.bf16.mxu0 %v550
        %655 = vmatmul.mubr.bf16.gmra.mrb[0].mxu0 %v377
        %v656 = vpop.f32.mrb[0].mxu0
        %v657 = vadd.f32 0.0, %v656
        %v658 = vpop.f32.mrb[0].mxu0
        %v659 = vadd.f32 0.0, %v658
        %v660 = vpop.f32.mrb[0].mxu0
        %v661 = vadd.f32 0.0, %v660
        %v662 = vpop.f32.mrb[0].mxu0
        %v663 = vadd.f32 0.0, %v662
        %664 = vdwg.mxu0
        %v665 = vld [vmem:[%s4] sm:$0xff]
        %v666 = vld [vmem:[%s4 + $0x8] sm:$0xff]
        %v667 = vld [vmem:[%s4 + $0x10] sm:$0xff]
        %v668 = vld [vmem:[%s4 + $0x18] sm:$0xff]
        %v669 = vld [vmem:[%s4 + $0x20] sm:$0xff]
        %v670 = vld [vmem:[%s4 + $0x28] sm:$0xff]
        %v671 = vld [vmem:[%s4 + $0x30] sm:$0xff]
        %v672 = vld [vmem:[%s4 + $0x38] sm:$0xff]
        %v673 = vld [vmem:[%s4 + $0x40] sm:$0xff]
        %v674 = vld [vmem:[%s4 + $0x48] sm:$0xff]
        %v675 = vld [vmem:[%s4 + $0x50] sm:$0xff]
        %v676 = vld [vmem:[%s4 + $0x58] sm:$0xff]
        %v677 = vld [vmem:[%s4 + $0x60] sm:$0xff]
        %v678 = vld [vmem:[%s4 + $0x68] sm:$0xff]
        %v679 = vld [vmem:[%s4 + $0x70] sm:$0xff]
        %v680 = vld [vmem:[%s4 + $0x78] sm:$0xff]
        %682 = vset.pattern.permute.xlu0 0
        %683 = vperm.xlu0 %682, %v665
        %v684 = vpop.permute.xlu0 %683
        %687 = vset.pattern.permute.xlu0 0
        %688 = vperm.xlu0 %687, %v666
        %v689 = vpop.permute.xlu0 %688
        %692 = vset.pattern.permute.xlu0 0
        %693 = vperm.xlu0 %692, %v667
        %v694 = vpop.permute.xlu0 %693
        %697 = vset.pattern.permute.xlu0 0
        %698 = vperm.xlu0 %697, %v668
        %v699 = vpop.permute.xlu0 %698
        %702 = vset.pattern.permute.xlu0 0
        %703 = vperm.xlu0 %702, %v669
        %v704 = vpop.permute.xlu0 %703
        %707 = vset.pattern.permute.xlu0 0
        %708 = vperm.xlu0 %707, %v670
        %v709 = vpop.permute.xlu0 %708
        %712 = vset.pattern.permute.xlu0 0
        %713 = vperm.xlu0 %712, %v671
        %v714 = vpop.permute.xlu0 %713
        %717 = vset.pattern.permute.xlu0 0
        %718 = vperm.xlu0 %717, %v672
        %v719 = vpop.permute.xlu0 %718
        %722 = vset.pattern.permute.xlu0 0
        %723 = vperm.xlu0 %722, %v673
        %v724 = vpop.permute.xlu0 %723
        %727 = vset.pattern.permute.xlu0 0
        %728 = vperm.xlu0 %727, %v674
        %v729 = vpop.permute.xlu0 %728
        %732 = vset.pattern.permute.xlu0 0
        %733 = vperm.xlu0 %732, %v675
        %v734 = vpop.permute.xlu0 %733
        %737 = vset.pattern.permute.xlu0 0
        %738 = vperm.xlu0 %737, %v676
        %v739 = vpop.permute.xlu0 %738
        %742 = vset.pattern.permute.xlu0 0
        %743 = vperm.xlu0 %742, %v677
        %v744 = vpop.permute.xlu0 %743
        %747 = vset.pattern.permute.xlu0 0
        %748 = vperm.xlu0 %747, %v678
        %v749 = vpop.permute.xlu0 %748
        %752 = vset.pattern.permute.xlu0 0
        %753 = vperm.xlu0 %752, %v679
        %v754 = vpop.permute.xlu0 %753
        %757 = vset.pattern.permute.xlu0 0
        %758 = vperm.xlu0 %757, %v680
        %v759 = vpop.permute.xlu0 %758
        %v761 = vmul.f32 %v587, %v684
        %v762 = vmul.f32 %v589, %v684
        %v763 = vmul.f32 %v591, %v689
        %v764 = vmul.f32 %v593, %v689
        %v765 = vmul.f32 %v597, %v694
        %v766 = vmul.f32 %v599, %v694
        %v767 = vmul.f32 %v601, %v699
        %v768 = vmul.f32 %v603, %v699
        %v769 = vmul.f32 %v607, %v704
        %v770 = vmul.f32 %v609, %v704
        %v771 = vmul.f32 %v611, %v709
        %v772 = vmul.f32 %v613, %v709
        %v773 = vmul.f32 %v617, %v714
        %v774 = vmul.f32 %v619, %v714
        %v775 = vmul.f32 %v621, %v719
        %v776 = vmul.f32 %v623, %v719
        %v777 = vmul.f32 %v627, %v724
        %v778 = vmul.f32 %v629, %v724
        %v779 = vmul.f32 %v631, %v729
        %v780 = vmul.f32 %v633, %v729
        %v781 = vmul.f32 %v637, %v734
        %v782 = vmul.f32 %v639, %v734
        %v783 = vmul.f32 %v641, %v739
        %v784 = vmul.f32 %v643, %v739
        %v785 = vmul.f32 %v647, %v744
        %v786 = vmul.f32 %v649, %v744
        %v787 = vmul.f32 %v651, %v749
        %v788 = vmul.f32 %v653, %v749
        %v789 = vmul.f32 %v657, %v754
        %v790 = vmul.f32 %v659, %v754
        %v791 = vmul.f32 %v661, %v759
        %v792 = vmul.f32 %v663, %v759
        %793 = vset.pattern.permute.xlu0 1
        %794 = vperm.xlu0 %793, %v665
        %v795 = vpop.permute.xlu0 %794
        %797 = vset.pattern.permute.xlu0 1
        %798 = vperm.xlu0 %797, %v666
        %v799 = vpop.permute.xlu0 %798
        %801 = vset.pattern.permute.xlu0 1
        %802 = vperm.xlu0 %801, %v667
        %v803 = vpop.permute.xlu0 %802
        %805 = vset.pattern.permute.xlu0 1
        %806 = vperm.xlu0 %805, %v668
        %v807 = vpop.permute.xlu0 %806
        %809 = vset.pattern.permute.xlu0 1
        %810 = vperm.xlu0 %809, %v669
        %v811 = vpop.permute.xlu0 %810
        %813 = vset.pattern.permute.xlu0 1
        %814 = vperm.xlu0 %813, %v670
        %v815 = vpop.permute.xlu0 %814
        %817 = vset.pattern.permute.xlu0 1
        %818 = vperm.xlu0 %817, %v671
        %v819 = vpop.permute.xlu0 %818
        %821 = vset.pattern.permute.xlu0 1
        %822 = vperm.xlu0 %821, %v672
        %v823 = vpop.permute.xlu0 %822
        %825 = vset.pattern.permute.xlu0 1
        %826 = vperm.xlu0 %825, %v673
        %v827 = vpop.permute.xlu0 %826
        %829 = vset.pattern.permute.xlu0 1
        %830 = vperm.xlu0 %829, %v674
        %v831 = vpop.permute.xlu0 %830
        %833 = vset.pattern.permute.xlu0 1
        %834 = vperm.xlu0 %833, %v675
        %v835 = vpop.permute.xlu0 %834
        %837 = vset.pattern.permute.xlu0 1
        %838 = vperm.xlu0 %837, %v676
        %v839 = vpop.permute.xlu0 %838
        %841 = vset.pattern.permute.xlu0 1
        %842 = vperm.xlu0 %841, %v677
        %v843 = vpop.permute.xlu0 %842
        %845 = vset.pattern.permute.xlu0 1
        %846 = vperm.xlu0 %845, %v678
        %v847 = vpop.permute.xlu0 %846
        %849 = vset.pattern.permute.xlu0 1
        %850 = vperm.xlu0 %849, %v679
        %v851 = vpop.permute.xlu0 %850
        %853 = vset.pattern.permute.xlu0 1
        %854 = vperm.xlu0 %853, %v680
        %v855 = vpop.permute.xlu0 %854
        %v857 = vadd.f32 %v761, %v795
        %v858 = vadd.f32 %v762, %v795
        %v859 = vadd.f32 %v763, %v799
        %v860 = vadd.f32 %v764, %v799
        %v861 = vadd.f32 %v765, %v803
        %v862 = vadd.f32 %v766, %v803
        %v863 = vadd.f32 %v767, %v807
        %v864 = vadd.f32 %v768, %v807
        %v865 = vadd.f32 %v769, %v811
        %v866 = vadd.f32 %v770, %v811
        %v867 = vadd.f32 %v771, %v815
        %v868 = vadd.f32 %v772, %v815
        %v869 = vadd.f32 %v773, %v819
        %v870 = vadd.f32 %v774, %v819
        %v871 = vadd.f32 %v775, %v823
        %v872 = vadd.f32 %v776, %v823
        %v873 = vadd.f32 %v777, %v827
        %v874 = vadd.f32 %v778, %v827
        %v875 = vadd.f32 %v779, %v831
        %v876 = vadd.f32 %v780, %v831
        %v877 = vadd.f32 %v781, %v835
        %v878 = vadd.f32 %v782, %v835
        %v879 = vadd.f32 %v783, %v839
        %v880 = vadd.f32 %v784, %v839
        %v881 = vadd.f32 %v785, %v843
        %v882 = vadd.f32 %v786, %v843
        %v883 = vadd.f32 %v787, %v847
        %v884 = vadd.f32 %v788, %v847
        %v885 = vadd.f32 %v789, %v851
        %v886 = vadd.f32 %v790, %v851
        %v887 = vadd.f32 %v791, %v855
        %v888 = vadd.f32 %v792, %v855
        %v889 = vmax.f32 %v857, 0.0
        %v890 = vmax.f32 %v858, 0.0
        %v891 = vmax.f32 %v859, 0.0
        %v892 = vmax.f32 %v860, 0.0
        %v893 = vmax.f32 %v861, 0.0
        %v894 = vmax.f32 %v862, 0.0
        %v895 = vmax.f32 %v863, 0.0
        %v896 = vmax.f32 %v864, 0.0
        %v897 = vmax.f32 %v865, 0.0
        %v898 = vmax.f32 %v866, 0.0
        %v899 = vmax.f32 %v867, 0.0
        %v900 = vmax.f32 %v868, 0.0
        %v901 = vmax.f32 %v869, 0.0
        %v902 = vmax.f32 %v870, 0.0
        %v903 = vmax.f32 %v871, 0.0
        %v904 = vmax.f32 %v872, 0.0
        %v905 = vmax.f32 %v873, 0.0
        %v906 = vmax.f32 %v874, 0.0
        %v907 = vmax.f32 %v875, 0.0
        %v908 = vmax.f32 %v876, 0.0
        %v909 = vmax.f32 %v877, 0.0
        %v910 = vmax.f32 %v878, 0.0
        %v911 = vmax.f32 %v879, 0.0
        %v912 = vmax.f32 %v880, 0.0
        %v913 = vmax.f32 %v881, 0.0
        %v914 = vmax.f32 %v882, 0.0
        %v915 = vmax.f32 %v883, 0.0
        %v916 = vmax.f32 %v884, 0.0
        %v917 = vmax.f32 %v885, 0.0
        %v918 = vmax.f32 %v886, 0.0
        %v919 = vmax.f32 %v887, 0.0
        %v920 = vmax.f32 %v888, 0.0
        %v921 = vpack.c.bf16 %v891, %v889
        %v922 = vpack.c.bf16 %v892, %v890
        %v923 = vpack.c.bf16 %v895, %v893
        %v924 = vpack.c.bf16 %v896, %v894
        %v925 = vpack.c.bf16 %v899, %v897
        %v926 = vpack.c.bf16 %v900, %v898
        %v927 = vpack.c.bf16 %v903, %v901
        %v928 = vpack.c.bf16 %v904, %v902
        %v929 = vpack.c.bf16 %v907, %v905
        %v930 = vpack.c.bf16 %v908, %v906
        %v931 = vpack.c.bf16 %v911, %v909
        %v932 = vpack.c.bf16 %v912, %v910
        %v933 = vpack.c.bf16 %v915, %v913
        %v934 = vpack.c.bf16 %v916, %v914
        %v935 = vpack.c.bf16 %v919, %v917
        %v936 = vpack.c.bf16 %v920, %v918
        %v937 = vld [vmem:[%s5] sm:$0xff]
        %v938 = vld [vmem:[%s5 + $0x8] sm:$0xff]
        %v939 = vld [vmem:[%s5 + $0x10] sm:$0xff]
        %v940 = vld [vmem:[%s5 + $0x18] sm:$0xff]
        %v941 = vunpack.c.l.bf16 %v271
        %v942 = vunpack.c.h.bf16 %v271
        %v943 = vadd.f32 %v941, %v942
        %944 = vadd.xlane.f32.xlu0 %v943
        %v945 = vpop.xlane.xlu0 %944
        %v946 = vrcp.pop 256.0
        %v947 = vmul.f32 %v945, %v946
        %v948 = vld [vmem:[%s2] sm:$0xf]
        %v949 = vld [vmem:[%s2 + $0x4] sm:$0xf]
        %v950 = vld [vmem:[%s2 + $0x8] sm:$0xf]
        %v951 = vld [vmem:[%s2 + $0xc] sm:$0xf]
        %v952 = vpack.c.bf16 %v947, %v947
        %v957 = vunpack.c.l.b16 %v948
        %v958 = vunpack.c.l.b16 %v949
        %v959 = vunpack.c.l.b16 %v950
        %v960 = vunpack.c.l.b16 %v951
        %v961 = vpack.c.b16 %v958, %v957
        %v962 = vpack.c.b16 %v960, %v959
        %vm963 = vcmask 64512
        %v965 = vsel %vm963, %v961, 0
        %v968 = vsel %vm963, %v962, 0
        %vm970 = vcmask 1043456
        %v972 = vsel %vm970, %v952, 0
        %974 = vmatprep.subr.bf16.mxu0 0
        %975 = vmatpush1.bf16.msra.mxu0 %v972
        %976 = vmatprep.subr.bf16.mxu0 0
        %977 = vmatpush1.bf16.msra.mxu0 0
        %978 = vmatprep.subr.bf16.mxu0 0
        %979 = vmatpush1.bf16.msra.mxu0 0
        %980 = vmatprep.subr.bf16.mxu0 0
        %981 = vmatpush1.bf16.msra.mxu0 0
        %982 = vmatprep.subr.bf16.mxu0 0
        %983 = vmatpush1.bf16.msra.mxu0 0
        %984 = vmatprep.subr.bf16.mxu0 0
        %985 = vmatpush1.bf16.msra.mxu0 0
        %986 = vmatprep.subr.bf16.mxu0 0
        %987 = vmatpush1.bf16.msra.mxu0 0
        %988 = vmatprep.subr.bf16.mxu0 0
        %989 = vmatpush1.bf16.msra.mxu0 0
        %990 = vmatprep.subr.bf16.mxu0 0
        %991 = vmatpush1.bf16.msra.mxu0 0
        %992 = vmatprep.subr.bf16.mxu0 0
        %993 = vmatpush1.bf16.msra.mxu0 0
        %994 = vmatprep.subr.bf16.mxu0 0
        %995 = vmatpush1.bf16.msra.mxu0 0
        %996 = vmatprep.subr.bf16.mxu0 0
        %997 = vmatpush1.bf16.msra.mxu0 0
        %998 = vmatprep.subr.bf16.mxu0 0
        %999 = vmatpush1.bf16.msra.mxu0 0
        %1000 = vmatprep.subr.bf16.mxu0 0
        %1001 = vmatpush1.bf16.msra.mxu0 0
        %1002 = vmatprep.subr.bf16.mxu0 0
        %1003 = vmatpush1.bf16.msra.mxu0 0
        %1004 = vmatprep.subr.bf16.mxu0 0
        %1005 = vmatpush1.bf16.msra.mxu0 0
        %1006 = vmatprep.mubr.bf16.mxu0 0
        %1007 = vmatmul.mubr.bf16.gmra.mrb[0].mxu0 %v965
        %v1008 = vpop.f32.mrb[0].mxu0
        %v1009 = vadd.f32 0.0, %v1008
        %v1010 = vpop.f32.mrb[0].mxu0
        %v1011 = vpop.f32.mrb[0].mxu0
        %v1012 = vadd.f32 0.0, %v1011
        %v1013 = vpop.f32.mrb[0].mxu0
        %1014 = vmatprep.mubr.bf16.mxu0 0
        %1015 = vmatmul.mubr.bf16.gmra.mrb[0].mxu0 %v968
        %v1016 = vpop.f32.mrb[0].mxu0
        %v1017 = vadd.f32 0.0, %v1016
        %v1018 = vpop.f32.mrb[0].mxu0
        %v1019 = vpop.f32.mrb[0].mxu0
        %v1020 = vadd.f32 0.0, %v1019
        %v1021 = vpop.f32.mrb[0].mxu0
        %1022 = vdwg.mxu0
        %v1023 = vmul.f32 %v1009, %v937
        %v1024 = vmul.f32 %v1012, %v938
        %v1025 = vmul.f32 %v1017, %v939
        %v1026 = vmul.f32 %v1020, %v940
        %1031 = vrot.lane.b32.xlu0 %v937, 127
        %v1032 = vpop.permute.xlu0 %1031
        %1033 = vrot.lane.b32.xlu0 %v938, 127
        %v1034 = vpop.permute.xlu0 %1033
        %1035 = vrot.lane.b32.xlu0 %v939, 127
        %v1036 = vpop.permute.xlu0 %1035
        %1037 = vrot.lane.b32.xlu0 %v940, 127
        %v1038 = vpop.permute.xlu0 %1037
        %v1043 = vadd.f32 %v1023, %v1032
        %v1044 = vadd.f32 %v1024, %v1034
        %v1045 = vadd.f32 %v1025, %v1036
        %v1046 = vadd.f32 %v1026, %v1038
        %v1047 = vmax.f32 %v1043, 0.0
        %v1048 = vmax.f32 %v1044, 0.0
        %v1049 = vmax.f32 %v1045, 0.0
        %v1050 = vmax.f32 %v1046, 0.0
        %v1051 = vpack.c.bf16 %v1048, %v1047
        %v1052 = vpack.c.bf16 %v1050, %v1049
        %v1053 = vld [vmem:[%s3] sm:$0xff]
        %v1054 = vld [vmem:[%s3 + $0x8] sm:$0xff]
        %v1055 = vld [vmem:[%s3 + $0x10] sm:$0xff]
        %v1056 = vld [vmem:[%s3 + $0x18] sm:$0xff]
        %v1061 = vunpack.c.h.b16 %v1053
        %v1062 = vunpack.c.h.b16 %v1054
        %v1063 = vunpack.c.h.b16 %v1055
        %v1064 = vunpack.c.h.b16 %v1056
        %v1065 = vpack.c.b16 %v1062, %v1061
        %v1066 = vpack.c.b16 %v1064, %v1063
        %vm1067 = vcmask 261120
        %v1069 = vsel %vm1067, %v1065, 0
        %v1072 = vsel %vm1067, %v1066, 0
        %1074 = vmatprep.subr.bf16.mxu0 0
        %1075 = vmatpush1.bf16.msra.mxu0 %v1051
        %1076 = vmatprep.subr.bf16.mxu0 0
        %1077 = vmatpush1.bf16.msra.mxu0 %v1052
        %1078 = vmatprep.subr.bf16.mxu0 0
        %1079 = vmatpush1.bf16.msra.mxu0 0
        %1080 = vmatprep.subr.bf16.mxu0 0
        %1081 = vmatpush1.bf16.msra.mxu0 0
        %1082 = vmatprep.subr.bf16.mxu0 0
        %1083 = vmatpush1.bf16.msra.mxu0 0
        %1084 = vmatprep.subr.bf16.mxu0 0
        %1085 = vmatpush1.bf16.msra.mxu0 0
        %1086 = vmatprep.subr.bf16.mxu0 0
        %1087 = vmatpush1.bf16.msra.mxu0 0
        %1088 = vmatprep.subr.bf16.mxu0 0
        %1089 = vmatpush1.bf16.msra.mxu0 0
        %1090 = vmatprep.subr.bf16.mxu0 0
        %1091 = vmatpush1.bf16.msra.mxu0 0
        %1092 = vmatprep.subr.bf16.mxu0 0
        %1093 = vmatpush1.bf16.msra.mxu0 0
        %1094 = vmatprep.subr.bf16.mxu0 0
        %1095 = vmatpush1.bf16.msra.mxu0 0
        %1096 = vmatprep.subr.bf16.mxu0 0
        %1097 = vmatpush1.bf16.msra.mxu0 0
        %1098 = vmatprep.subr.bf16.mxu0 0
        %1099 = vmatpush1.bf16.msra.mxu0 0
        %1100 = vmatprep.subr.bf16.mxu0 0
        %1101 = vmatpush1.bf16.msra.mxu0 0
        %1102 = vmatprep.subr.bf16.mxu0 0
        %1103 = vmatpush1.bf16.msra.mxu0 0
        %1104 = vmatprep.subr.bf16.mxu0 0
        %1105 = vmatpush1.bf16.msra.mxu0 0
        %1106 = vmatprep.mubr.bf16.mxu0 0
        %1107 = vmatmul.mubr.bf16.gmra.mrb[0].mxu0 %v1069
        %v1108 = vpop.f32.mrb[0].mxu0
        %v1109 = vadd.f32 0.0, %v1108
        %v1110 = vpop.f32.mrb[0].mxu0
        %v1111 = vpop.f32.mrb[0].mxu0
        %v1112 = vadd.f32 0.0, %v1111
        %v1113 = vpop.f32.mrb[0].mxu0
        %1114 = vmatprep.mubr.bf16.mxu0 0
        %1115 = vmatmul.mubr.bf16.gmra.mrb[0].mxu0 %v1072
        %v1116 = vpop.f32.mrb[0].mxu0
        %v1117 = vadd.f32 0.0, %v1116
        %v1118 = vpop.f32.mrb[0].mxu0
        %v1119 = vpop.f32.mrb[0].mxu0
        %v1120 = vadd.f32 0.0, %v1119
        %v1121 = vpop.f32.mrb[0].mxu0
        %1122 = vdwg.mxu0
        %1124 = vset.pattern.permute.xlu0 0
        %1125 = vperm.xlu0 %1124, %v1109
        %v1126 = vpop.permute.xlu0 %1125
        %1129 = vset.pattern.permute.xlu0 0
        %1130 = vperm.xlu0 %1129, %v1112
        %v1131 = vpop.permute.xlu0 %1130
        %1134 = vset.pattern.permute.xlu0 0
        %1135 = vperm.xlu0 %1134, %v1117
        %v1136 = vpop.permute.xlu0 %1135
        %1139 = vset.pattern.permute.xlu0 0
        %1140 = vperm.xlu0 %1139, %v1120
        %v1141 = vpop.permute.xlu0 %1140
        %v1143 = vunpack.c.l.b16 %v1053
        %v1144 = vunpack.c.l.b16 %v1054
        %v1145 = vunpack.c.l.b16 %v1055
        %v1146 = vunpack.c.l.b16 %v1056
        %v1147 = vpack.c.b16 %v1144, %v1143
        %v1148 = vpack.c.b16 %v1146, %v1145
        %1151 = vmatprep.subr.bf16.mxu0 %v922
        %1152 = vmatpush1.bf16.msra.mxu0 %v921
        %1153 = vmatprep.subr.bf16.mxu0 %v924
        %1154 = vmatpush1.bf16.msra.mxu0 %v923
        %1155 = vmatprep.subr.bf16.mxu0 %v926
        %1156 = vmatpush1.bf16.msra.mxu0 %v925
        %1157 = vmatprep.subr.bf16.mxu0 %v928
        %1158 = vmatpush1.bf16.msra.mxu0 %v927
        %1159 = vmatprep.subr.bf16.mxu0 %v930
        %1160 = vmatpush1.bf16.msra.mxu0 %v929
        %1161 = vmatprep.subr.bf16.mxu0 %v932
        %1162 = vmatpush1.bf16.msra.mxu0 %v931
        %1163 = vmatprep.subr.bf16.mxu0 %v934
        %1164 = vmatpush1.bf16.msra.mxu0 %v933
        %1165 = vmatprep.subr.bf16.mxu0 %v936
        %1166 = vmatpush1.bf16.msra.mxu0 %v935
        %1167 = vmatprep.subr.bf16.mxu0 0
        %1168 = vmatpush1.bf16.msra.mxu0 0
        %1169 = vmatprep.subr.bf16.mxu0 0
        %1170 = vmatpush1.bf16.msra.mxu0 0
        %1171 = vmatprep.subr.bf16.mxu0 0
        %1172 = vmatpush1.bf16.msra.mxu0 0
        %1173 = vmatprep.subr.bf16.mxu0 0
        %1174 = vmatpush1.bf16.msra.mxu0 0
        %1175 = vmatprep.subr.bf16.mxu0 0
        %1176 = vmatpush1.bf16.msra.mxu0 0
        %1177 = vmatprep.subr.bf16.mxu0 0
        %1178 = vmatpush1.bf16.msra.mxu0 0
        %1179 = vmatprep.subr.bf16.mxu0 0
        %1180 = vmatpush1.bf16.msra.mxu0 0
        %1181 = vmatprep.subr.bf16.mxu0 0
        %1182 = vmatpush1.bf16.msra.mxu0 0
        %1183 = vmatprep.mubr.bf16.mxu0 0
        %1184 = vmatmul.mubr.bf16.gmra.mrb[0].mxu0 %v1147
        %v1185 = vpop.f32.mrb[0].mxu0
        %v1186 = vadd.f32 %v1126, %v1185
        %v1187 = vpop.f32.mrb[0].mxu0
        %v1188 = vadd.f32 %v1126, %v1187
        %v1189 = vpop.f32.mrb[0].mxu0
        %v1190 = vadd.f32 %v1131, %v1189
        %v1191 = vpop.f32.mrb[0].mxu0
        %v1192 = vadd.f32 %v1131, %v1191
        %1193 = vmatprep.mubr.bf16.mxu0 0
        %1194 = vmatmul.mubr.bf16.gmra.mrb[0].mxu0 %v1148
        %v1195 = vpop.f32.mrb[0].mxu0
        %v1196 = vadd.f32 %v1136, %v1195
        %v1197 = vpop.f32.mrb[0].mxu0
        %v1198 = vadd.f32 %v1136, %v1197
        %v1199 = vpop.f32.mrb[0].mxu0
        %v1200 = vadd.f32 %v1141, %v1199
        %v1201 = vpop.f32.mrb[0].mxu0
        %v1202 = vadd.f32 %v1141, %v1201
        %1203 = vdwg.mxu0
        %1204 = vset.pattern.permute.xlu0 2
        %1205 = vperm.xlu0 %1204, %v937
        %v1206 = vpop.permute.xlu0 %1205
        %1208 = vset.pattern.permute.xlu0 2
        %1209 = vperm.xlu0 %1208, %v938
        %v1210 = vpop.permute.xlu0 %1209
        %1212 = vset.pattern.permute.xlu0 2
        %1213 = vperm.xlu0 %1212, %v939
        %v1214 = vpop.permute.xlu0 %1213
        %1216 = vset.pattern.permute.xlu0 2
        %1217 = vperm.xlu0 %1216, %v940
        %v1218 = vpop.permute.xlu0 %1217
        %v1220 = vmul.f32 %v1186, %v1206
        %v1221 = vmul.f32 %v1188, %v1206
        %v1222 = vmul.f32 %v1190, %v1210
        %v1223 = vmul.f32 %v1192, %v1210
        %v1224 = vmul.f32 %v1196, %v1214
        %v1225 = vmul.f32 %v1198, %v1214
        %v1226 = vmul.f32 %v1200, %v1218
        %v1227 = vmul.f32 %v1202, %v1218
        %1228 = vset.pattern.permute.xlu0 3
        %1229 = vperm.xlu0 %1228, %v937
        %v1230 = vpop.permute.xlu0 %1229
        %1232 = vset.pattern.permute.xlu0 3
        %1233 = vperm.xlu0 %1232, %v938
        %v1234 = vpop.permute.xlu0 %1233
        %1236 = vset.pattern.permute.xlu0 3
        %1237 = vperm.xlu0 %1236, %v939
        %v1238 = vpop.permute.xlu0 %1237
        %1240 = vset.pattern.permute.xlu0 3
        %1241 = vperm.xlu0 %1240, %v940
        %v1242 = vpop.permute.xlu0 %1241
        %v1244 = vadd.f32 %v1220, %v1230
        %v1245 = vadd.f32 %v1221, %v1230
        %v1246 = vadd.f32 %v1222, %v1234
        %v1247 = vadd.f32 %v1223, %v1234
        %v1248 = vadd.f32 %v1224, %v1238
        %v1249 = vadd.f32 %v1225, %v1238
        %v1250 = vadd.f32 %v1226, %v1242
        %v1251 = vadd.f32 %v1227, %v1242
        %v1252 = vmax.f32 %v1244, 0.0
        %v1253 = vmax.f32 %v1245, 0.0
        %v1254 = vmax.f32 %v1246, 0.0
        %v1255 = vmax.f32 %v1247, 0.0
        %v1256 = vmax.f32 %v1248, 0.0
        %v1257 = vmax.f32 %v1249, 0.0
        %v1258 = vmax.f32 %v1250, 0.0
        %v1259 = vmax.f32 %v1251, 0.0
        %1260 = vst [vmem:[%s269] sm:$0xff] %v1252
        %1261 = vst [vmem:[%s269 + $0x8] sm:$0xff] %v1253
        %1262 = vst [vmem:[%s269 + $0x10] sm:$0xff] %v1254
        %1263 = vst [vmem:[%s269 + $0x18] sm:$0xff] %v1255
        %1264 = vst [vmem:[%s269 + $0x20] sm:$0xff] %v1256
        %1265 = vst [vmem:[%s269 + $0x28] sm:$0xff] %v1257
        %1266 = vst [vmem:[%s269 + $0x30] sm:$0xff] %v1258
        %1267 = vst [vmem:[%s269 + $0x38] sm:$0xff] %v1259
        %s1268 = sand.u32 %s162, 1
        %s1269 = scalar_lea.sflag [#allocation4], %s1268
        %s1270 = sand.u32 %s162, 1
        %s1271 = smul.addr %s1270, 64
        %s1272 = scalar_lea.vmem [#allocation5], %s1271
        // Predicated region
        $region49: #{tpu_custom_call.1} parent=43 // pred_check
          %p1273 = pneg %p172
        $region50: #{tpu_custom_call.1} parent=43 // pred_check_branch
          %1275 = sbr.rel (%p1273) target = $region52
        $region51: #{tpu_custom_call.1} parent=43 // pred_region
          %s1277 = ssub.s32 1024, 1024
          %1278 = vsyncadd %s1269, %s1277
          %s1279 = smul.addr %s23, 8
          %s1280 = smul.addr %s1279, 128
          %s1281 = scalar_lea.hbm %s6, %s1280
          %s1282 = sshll.u32 %s1272, 4
          %s1283 = int_to_ptr.vmem [resolvable:$true] %s1282
          %1288 = dma.vmem_to_hbm [thread:$0]  %s1283, 1024, %s1281, %s1269, 256, 256, 16
        $region52: #{tpu_custom_call.1} parent=43 // pred_fallthru
          _
      $region44: #{tpu_custom_call.1} parent=5 // pred_fallthru
        _
      %p1289 = scmp.le.s32.totalorder 2, %s18
      // Predicated region
      $region53: #{tpu_custom_call.1} parent=5 // pred_check
        %p1290 = pneg %p1289
      $region54: #{tpu_custom_call.1} parent=5 // pred_check_branch
        %1292 = sbr.rel (%p1290) target = $region56
      $region55: #{tpu_custom_call.1} parent=5 // pred_region
        %s1293 = ssub.s32 %s18, 2
        // Predicated region
        $region57: #{tpu_custom_call.1} parent=55 // pred_check
          %p1294 = pneg %p178
        $region58: #{tpu_custom_call.1} parent=55 // pred_check_branch
          %1296 = sbr.rel (%p1294) target = $region60
        $region59: #{tpu_custom_call.1} parent=55 // pred_region
          %s1297 = sand.u32 %s163, 1
          %s1298 = scalar_lea.sflag [#allocation4], %s1297
          %s1299 = sand.u32 %s163, 1
          %s1300 = smul.addr %s1299, 64
          %s1301 = scalar_lea.vmem [#allocation5], %s1300
          %1302 = dma.done %s1298, 1024
        $region60: #{tpu_custom_call.1} parent=55 // pred_fallthru
          _
      $region56: #{tpu_custom_call.1} parent=5 // pred_fallthru
        _
    $region6: #{tpu_custom_call.1} parent=1 // loop_footer
      %s22 = sadd.s32 1, %s18
    $region7: #{tpu_custom_call.1} parent=1 // loop_footer_branch
      %17 = sbr.rel target = $region3
    $region8: #{tpu_custom_call.1} parent=1 // loop_exit
      _
    %1303 = vsyncpa [#allocation3], 1
    %s1304 = scalar_lea.sflag [#allocation3], 1
    %1305 = vsyncpa %s1304, 1
    %1306 = vsyncpa [#allocation4], 1
    %s1307 = scalar_lea.sflag [#allocation4], 1
    %1308 = vsyncpa %s1307, 1

</llo_original>
